<compile_context>
chip_gen: v7x
topology: tpu7x:2x2x1
jax: 0.10.0
libtpu: 0.0.40
codegen_flags: <defaults>
</compile_context>

<pallas_src>
import functools

import jax
import jax.numpy as jnp
from jax.experimental import pallas as pl
from jax.experimental.pallas import tpu as pltpu


_SUB = 16  # sublane packing for bf16 tiles


def _round_up(x, m):
    return ((x + m - 1) // m) * m


def _choose_bt(B, block_b):
    """Batch-tile size: multiple of 16, <= block_b, and >= 2 grid steps when B
    is large enough that splitting across v7x's two TensorCores helps."""
    if B <= _SUB:
        return _SUB
    half = _round_up(-(-B // 2), _SUB)        # cdiv(B, 2), sublane-rounded
    return max(_SUB, min(block_b, half))


def _policy_kernel(x_ref, w1_ref, b1_ref, w2_ref, b2_ref, wh_ref, bh_ref,
                   out_ref, *, A):
    # fc1 + ReLU  (bf16 x/W from HBM, f32 MXU accumulation)
    h1 = jnp.dot(x_ref[...], w1_ref[...],
                 preferred_element_type=jnp.float32) + b1_ref[...]
    h1 = jnp.maximum(h1, 0.0).astype(jnp.bfloat16)

    # fc2 + ReLU
    h2 = jnp.dot(h1, w2_ref[...],
                 preferred_element_type=jnp.float32) + b2_ref[...]
    h2 = jnp.maximum(h2, 0.0).astype(jnp.bfloat16)

    # fused heads: cols [0,A) = mean, cols [A,2A) = std-head pre-activation,
    # cols >= 2A are padding (lane-dense NH-wide output).
    s = jnp.dot(h2, wh_ref[...],
                preferred_element_type=jnp.float32) + bh_ref[...]
    # tanh over all NH lanes: std lanes share vregs with mean/pad lanes, so
    # restricting the EUP work by lane saves nothing at vreg granularity.
    t = 5.0 * (jnp.tanh(s) + 1.0)
    col = jax.lax.broadcasted_iota(jnp.int32, s.shape, 1)
    out_ref[...] = jnp.where(col < A, s, t).astype(out_ref.dtype)


def prepare_params(params):
    """One-time static weight packing (call OUTSIDE the hot loop).

    Returns (prep, A): prep is a dict of device arrays
      w1 [obs,512] bf16, b1 [1,512] f32, w2 [512,256] bf16, b2 [1,256] f32,
      wh [256,NH] bf16 (fused mean|std head, lane-dense NH>=128), bh [1,NH] f32.
    """
    A = params["wm"].shape[1]
    NH = max(128, _round_up(2 * A, 128))

    wh = jnp.zeros((256, NH), jnp.float32)
    wh = wh.at[:, :A].set(params["wm"]).at[:, A:2 * A].set(params["ws"])
    bh = jnp.zeros((1, NH), jnp.float32)
    bh = bh.at[:, :A].set(params["bm"][0]).at[:, A:2 * A].set(params["bs"][0])

    prep = dict(
        w1=params["w1"].astype(jnp.bfloat16),
        b1=params["b1"].astype(jnp.float32),
        w2=params["w2"].astype(jnp.bfloat16),
        b2=params["b2"].astype(jnp.float32),
        wh=wh.astype(jnp.bfloat16),
        bh=bh.astype(jnp.float32),
    )
    return prep, A


def policy_network_forward(x, prep, A, *, block_b=1024):
    """x: [B, obs_dim] float32. prep/A from prepare_params().

    Returns (mean, logstd), both float32 [B, A].
    """
    B, obs_dim = x.shape
    NH = prep["wh"].shape[1]

    bt = _choose_bt(B, block_b)
    B_pad = _round_up(B, bt)
    grid = (B_pad // bt,)

    # bf16 cast (halves x DMA bytes); the ragged-tail pad, when needed, fuses
    # with the cast into a single pass over x.
    x16 = x.astype(jnp.bfloat16)
    if B_pad != B:
        x16 = jnp.pad(x16, ((0, B_pad - B), (0, 0)))

    out = pl.pallas_call(
        functools.partial(_policy_kernel, A=A),
        out_shape=jax.ShapeDtypeStruct((B_pad, NH), jnp.bfloat16),
        grid_spec=pltpu.PrefetchScalarGridSpec(
            num_scalar_prefetch=0,
            grid=grid,
            in_specs=[
                pl.BlockSpec((bt, obs_dim), lambda i: (i, 0)),        # x tile
                pl.BlockSpec(prep["w1"].shape, lambda i: (0, 0)),     # VMEM-resident
                pl.BlockSpec(prep["b1"].shape, lambda i: (0, 0)),
                pl.BlockSpec(prep["w2"].shape, lambda i: (0, 0)),
                pl.BlockSpec(prep["b2"].shape, lambda i: (0, 0)),
                pl.BlockSpec(prep["wh"].shape, lambda i: (0, 0)),
                pl.BlockSpec(prep["bh"].shape, lambda i: (0, 0)),
            ],
            out_specs=pl.BlockSpec((bt, NH), lambda i: (i, 0)),       # lane-dense slab
        ),
        compiler_params=pltpu.CompilerParams(
            dimension_semantics=("parallel",),
        ),
    )(x16, prep["w1"], prep["b1"], prep["w2"], prep["b2"],
      prep["wh"], prep["bh"])

    mean = out[:B, :A].astype(jnp.float32)
    logstd = out[:B, A:2 * A].astype(jnp.float32)
    return mean, logstd


def init_params(key, obs_dim, A):
    """Deterministic init mimicking nn.Linear's U(-1/sqrt(fan_in), 1/sqrt(fan_in))."""
    def linear(k, fan_in, fan_out):
        kw, kb = jax.random.split(k)
        bound = 1.0 / jnp.sqrt(fan_in)
        w = jax.random.uniform(kw, (fan_in, fan_out), jnp.float32, -bound, bound)
        b = jax.random.uniform(kb, (1, fan_out), jnp.float32, -bound, bound)
        return w, b

    k1, k2, k3, k4 = jax.random.split(key, 4)
    w1, b1 = linear(k1, obs_dim, 512)
    w2, b2 = linear(k2, 512, 256)
    wm, bm = linear(k3, 256, A)
    ws, bs = linear(k4, 256, A)
    return dict(w1=w1, b1=b1, w2=w2, b2=b2, wm=wm, bm=bm, ws=ws, bs=bs)


def reference_forward(x, p):
    """Pure-JAX reference with matching bf16-matmul / f32-accumulate semantics."""
    bf = lambda a: a.astype(jnp.bfloat16)
    h1 = jnp.maximum(
        jnp.dot(bf(x), bf(p["w1"]), preferred_element_type=jnp.float32) + p["b1"], 0.0)
    h2 = jnp.maximum(
        jnp.dot(bf(h1), bf(p["w2"]), preferred_element_type=jnp.float32) + p["b2"], 0.0)
    mean = jnp.dot(bf(h2), bf(p["wm"]), preferred_element_type=jnp.float32) + p["bm"]
    logstd = 5.0 * (jnp.tanh(
        jnp.dot(bf(h2), bf(p["ws"]), preferred_element_type=jnp.float32) + p["bs"]) + 1.0)
    return mean, logstd


if __name__ == "__main__":
    key = jax.random.PRNGKey(0)
    kx, kx2, kp = jax.random.split(key, 3)

    obs_dim, A = 32, 8
    params = init_params(kp, obs_dim, A)
    prep, A_out = prepare_params(params)   # one-time, outside the hot path

    # Small single-tile case (B=2).
    B = 2
    x = jax.random.normal(kx, (B, obs_dim), jnp.float32)
    mean, logstd = policy_network_forward(x, prep, A_out)
    jax.block_until_ready((mean, logstd))
    ref_mean, ref_logstd = reference_forward(x, params)
    assert mean.shape == (B, A) and logstd.shape == (B, A)
    # bf16 matmul inputs + bf16 output slab -> relaxed tolerance vs the
    # (identically-quantized) reference.
    assert jnp.allclose(mean, ref_mean, atol=2e-2, rtol=2e-2)
    assert jnp.allclose(logstd, ref_logstd, atol=2e-2, rtol=2e-2)

    # Ragged multi-tile case (exercises tail padding + a >1-step grid).
    B2 = 100
    x2 = jax.random.normal(kx2, (B2, obs_dim), jnp.float32)
    mean2, logstd2 = policy_network_forward(x2, prep, A_out)
    jax.block_until_ready((mean2, logstd2))
    ref_mean2, ref_logstd2 = reference_forward(x2, params)
    assert mean2.shape == (B2, A) and logstd2.shape == (B2, A)
    assert jnp.allclose(mean2, ref_mean2, atol=2e-2, rtol=2e-2)
    assert jnp.allclose(logstd2, ref_logstd2, atol=2e-2, rtol=2e-2)

    print("KERNEL_OK")
</pallas_src>

<mosaic_0001>
module attributes {stable_mosaic.version = 11 : i64} {
  func.func @_policy_kernel(%arg0: i32, %arg1: memref<16x32xbf16, #tpu.memory_space<vmem>>, %arg2: memref<32x512xbf16, #tpu.memory_space<vmem>>, %arg3: memref<1x512xf32, #tpu.memory_space<vmem>>, %arg4: memref<512x256xbf16, #tpu.memory_space<vmem>>, %arg5: memref<1x256xf32, #tpu.memory_space<vmem>>, %arg6: memref<256x128xbf16, #tpu.memory_space<vmem>>, %arg7: memref<1x128xf32, #tpu.memory_space<vmem>>, %arg8: memref<16x128xbf16, #tpu.memory_space<vmem>>) attributes {dimension_semantics = [#tpu.dimension_semantics<parallel>], iteration_bounds = array<i64: 1>, scalar_prefetch = 0 : i64, scratch_operands = 0 : i64, tpu.core_type = #tpu.core_type<tc>, window_params = [{transform_indices = @transform_0, window_bounds = array<i64: 16, 32>}, {pipeline_mode = #tpu.pipeline_mode<synchronous>, transform_indices = @transform_1, window_bounds = array<i64: 32, 512>}, {pipeline_mode = #tpu.pipeline_mode<synchronous>, transform_indices = @transform_2, window_bounds = array<i64: 1, 512>}, {pipeline_mode = #tpu.pipeline_mode<synchronous>, transform_indices = @transform_3, window_bounds = array<i64: 512, 256>}, {pipeline_mode = #tpu.pipeline_mode<synchronous>, transform_indices = @transform_4, window_bounds = array<i64: 1, 256>}, {pipeline_mode = #tpu.pipeline_mode<synchronous>, transform_indices = @transform_5, window_bounds = array<i64: 256, 128>}, {pipeline_mode = #tpu.pipeline_mode<synchronous>, transform_indices = @transform_6, window_bounds = array<i64: 1, 128>}, {transform_indices = @transform_7, window_bounds = array<i64: 16, 128>}]} {
    %c0 = arith.constant 0 : index
    %c0_0 = arith.constant 0 : index
    %0 = vector.load %arg1[%c0, %c0_0] : memref<16x32xbf16, #tpu.memory_space<vmem>>, vector<16x32xbf16>
    %c0_1 = arith.constant 0 : index
    %c0_2 = arith.constant 0 : index
    %1 = vector.load %arg2[%c0_1, %c0_2] : memref<32x512xbf16, #tpu.memory_space<vmem>>, vector<32x512xbf16>
    %cst = arith.constant dense<0.000000e+00> : vector<16x512xf32>
    %2 = tpu.matmul %0, %1, %cst {dimension_numbers = #tpu.dot_dimension_numbers<[1], [0], [0], [1], [0, 0, 1, 1], [], []>} : vector<16x32xbf16>, vector<32x512xbf16>, vector<16x512xf32> -> vector<16x512xf32>
    %c0_3 = arith.constant 0 : index
    %c0_4 = arith.constant 0 : index
    %3 = vector.load %arg3[%c0_3, %c0_4] : memref<1x512xf32, #tpu.memory_space<vmem>>, vector<1x512xf32>
    %4 = vector.broadcast %3 : vector<1x512xf32> to vector<16x512xf32>
    %5 = arith.addf %2, %4 : vector<16x512xf32>
    %cst_5 = arith.constant 0.000000e+00 : f32
    %6 = vector.broadcast %cst_5 : f32 to vector<16x512xf32>
    %7 = arith.maximumf %5, %6 : vector<16x512xf32>
    %8 = arith.truncf %7 : vector<16x512xf32> to vector<16x512xbf16>
    %c0_6 = arith.constant 0 : index
    %c0_7 = arith.constant 0 : index
    %9 = vector.load %arg4[%c0_6, %c0_7] : memref<512x256xbf16, #tpu.memory_space<vmem>>, vector<512x256xbf16>
    %cst_8 = arith.constant dense<0.000000e+00> : vector<16x256xf32>
    %10 = tpu.matmul %8, %9, %cst_8 {dimension_numbers = #tpu.dot_dimension_numbers<[1], [0], [0], [1], [0, 0, 1, 1], [], []>} : vector<16x512xbf16>, vector<512x256xbf16>, vector<16x256xf32> -> vector<16x256xf32>
    %c0_9 = arith.constant 0 : index
    %c0_10 = arith.constant 0 : index
    %11 = vector.load %arg5[%c0_9, %c0_10] : memref<1x256xf32, #tpu.memory_space<vmem>>, vector<1x256xf32>
    %12 = vector.broadcast %11 : vector<1x256xf32> to vector<16x256xf32>
    %13 = arith.addf %10, %12 : vector<16x256xf32>
    %cst_11 = arith.constant 0.000000e+00 : f32
    %14 = vector.broadcast %cst_11 : f32 to vector<16x256xf32>
    %15 = arith.maximumf %13, %14 : vector<16x256xf32>
    %16 = arith.truncf %15 : vector<16x256xf32> to vector<16x256xbf16>
    %c0_12 = arith.constant 0 : index
    %c0_13 = arith.constant 0 : index
    %17 = vector.load %arg6[%c0_12, %c0_13] : memref<256x128xbf16, #tpu.memory_space<vmem>>, vector<256x128xbf16>
    %cst_14 = arith.constant dense<0.000000e+00> : vector<16x128xf32>
    %18 = tpu.matmul %16, %17, %cst_14 {dimension_numbers = #tpu.dot_dimension_numbers<[1], [0], [0], [1], [0, 0, 1, 1], [], []>} : vector<16x256xbf16>, vector<256x128xbf16>, vector<16x128xf32> -> vector<16x128xf32>
    %c0_15 = arith.constant 0 : index
    %c0_16 = arith.constant 0 : index
    %19 = vector.load %arg7[%c0_15, %c0_16] : memref<1x128xf32, #tpu.memory_space<vmem>>, vector<1x128xf32>
    %20 = vector.broadcast %19 : vector<1x128xf32> to vector<16x128xf32>
    %21 = arith.addf %18, %20 : vector<16x128xf32>
    %22 = math.tanh %21 : vector<16x128xf32>
    %cst_17 = arith.constant 1.000000e+00 : f32
    %23 = vector.broadcast %cst_17 : f32 to vector<16x128xf32>
    %24 = arith.addf %22, %23 : vector<16x128xf32>
    %cst_18 = arith.constant 5.000000e+00 : f32
    %25 = vector.broadcast %cst_18 : f32 to vector<16x128xf32>
    %26 = arith.mulf %25, %24 : vector<16x128xf32>
    %27 = tpu.iota {dimensions = array<i32: 1>} : vector<16x128xi32>
    %c8_i32 = arith.constant 8 : i32
    %28 = vector.broadcast %c8_i32 : i32 to vector<16x128xi32>
    %29 = arith.cmpi slt, %27, %28 : vector<16x128xi32>
    %30 = arith.select %29, %21, %26 : vector<16x128xi1>, vector<16x128xf32>
    %31 = arith.truncf %30 : vector<16x128xf32> to vector<16x128xbf16>
    %c0_19 = arith.constant 0 : index
    %c0_20 = arith.constant 0 : index
    %32 = vector.load %arg8[%c0_19, %c0_20] : memref<16x128xbf16, #tpu.memory_space<vmem>>, vector<16x128xbf16>
    tpu.vector_store %arg8[%c0_19, %c0_20], %31 {strides = array<i32>} : memref<16x128xbf16, #tpu.memory_space<vmem>>, vector<16x128xbf16>,
    return
  }
  func.func @transform_0(%arg0: i32) -> (i32, i32) {
    %c0_i32 = arith.constant 0 : i32
    %c0_i32_0 = arith.constant 0 : i32
    return %arg0, %c0_i32 : i32, i32
  }
  func.func @transform_1(%arg0: i32) -> (i32, i32) {
    %c0_i32 = arith.constant 0 : i32
    %c0_i32_0 = arith.constant 0 : i32
    %c0_i32_1 = arith.constant 0 : i32
    return %c0_i32, %c0_i32_0 : i32, i32
  }
  func.func @transform_2(%arg0: i32) -> (i32, i32) {
    %c0_i32 = arith.constant 0 : i32
    %c0_i32_0 = arith.constant 0 : i32
    %c0_i32_1 = arith.constant 0 : i32
    return %c0_i32, %c0_i32_0 : i32, i32
  }
  func.func @transform_3(%arg0: i32) -> (i32, i32) {
    %c0_i32 = arith.constant 0 : i32
    %c0_i32_0 = arith.constant 0 : i32
    %c0_i32_1 = arith.constant 0 : i32
    return %c0_i32, %c0_i32_0 : i32, i32
  }
  func.func @transform_4(%arg0: i32) -> (i32, i32) {
    %c0_i32 = arith.constant 0 : i32
    %c0_i32_0 = arith.constant 0 : i32
    %c0_i32_1 = arith.constant 0 : i32
    return %c0_i32, %c0_i32_0 : i32, i32
  }
  func.func @transform_5(%arg0: i32) -> (i32, i32) {
    %c0_i32 = arith.constant 0 : i32
    %c0_i32_0 = arith.constant 0 : i32
    %c0_i32_1 = arith.constant 0 : i32
    return %c0_i32, %c0_i32_0 : i32, i32
  }
  func.func @transform_6(%arg0: i32) -> (i32, i32) {
    %c0_i32 = arith.constant 0 : i32
    %c0_i32_0 = arith.constant 0 : i32
    %c0_i32_1 = arith.constant 0 : i32
    return %c0_i32, %c0_i32_0 : i32, i32
  }
  func.func @transform_7(%arg0: i32) -> (i32, i32) {
    %c0_i32 = arith.constant 0 : i32
    %c0_i32_0 = arith.constant 0 : i32
    return %arg0, %c0_i32 : i32, i32
  }
}

</mosaic_0001>

<llo_original>
// kernel: tpu_custom_call.1
$region0: #{tpu_custom_call.1}
  #allocation0 [shape = 'u32[]', space=smem, size = 0x4, offset = 0x4, fixed_abs, tag = 'smem constant byte address 0x4 - core index']
  #allocation1 [shape = 'u32[144,128]{1,0:T(1,128)}', space=vmem, size = 0x12000, scoped, tag = 'internal scratch']
  %s0 = inlined_call_operand.hbm [shape: bf16[16,32], index: 0, kind: input, shape index: {}]
  %s1 = inlined_call_operand.hbm [shape: bf16[32,512], index: 1, kind: input, shape index: {}]
  %s2 = inlined_call_operand.vmem [shape: f32[1,512], index: 2, kind: input, shape index: {}]
  %s3 = inlined_call_operand.hbm [shape: bf16[512,256], index: 3, kind: input, shape index: {}]
  %s4 = inlined_call_operand.vmem [shape: f32[1,256], index: 4, kind: input, shape index: {}]
  %s5 = inlined_call_operand.hbm [shape: bf16[256,128], index: 5, kind: input, shape index: {}]
  %s6 = inlined_call_operand.vmem [shape: f32[1,128], index: 6, kind: input, shape index: {}]
  %s7 = inlined_call_operand.hbm [shape: bf16[16,128], index: 7, kind: output, shape index: {}]
  %s8 = sld [smem:[#allocation0]]
  $region54: #{tpu_custom_call.1} parent=0
    _
  %s10 = ssub.s32 1, %s8
  %s11 = scalar_select 0, %s10, %s8
  $region1: #{tpu_custom_call.1} parent=0
    #allocation2 [shape = 'u8[4096]{0}', space=vmem, size = 0x1000, scoped, tag = 'input window, operand 0, single buffered']
    #allocation3 [shape = 's32[1]{0}', space=sflag, size = 0x4, scoped, tag = 'scoped memory for tpu_custom_call.1']
    #allocation4 [shape = 's32[1]{0}', space=sflag, size = 0x4, scoped, tag = 'scoped memory for tpu_custom_call.1']
    #allocation5 [shape = 'u8[32768]{0}', space=vmem, size = 0x8000, scoped, tag = 'input window, operand 1, single buffered']
    #allocation6 [shape = 's32[1]{0}', space=sflag, size = 0x4, scoped, tag = 'scoped memory for tpu_custom_call.1']
    #allocation7 [shape = 'u8[262144]{0}', space=vmem, size = 0x40000, scoped, tag = 'input window, operand 3, single buffered']
    #allocation8 [shape = 'u8[65536]{0}', space=vmem, size = 0x10000, scoped, tag = 'input window, operand 5, single buffered']
    #allocation9 [shape = 's32[1]{0}', space=sflag, size = 0x4, scoped, tag = 'scoped memory for tpu_custom_call.1']
    #allocation10 [shape = 'u8[4096]{0}', space=vmem, size = 0x1000, scoped, tag = 'output window, operand 0, single buffered']
    %12 = vsyncpa [#allocation3], 0
    %13 = vsyncpa [#allocation6], 0
    %14 = vsyncpa [#allocation9], 0
    %15 = vsyncpa [#allocation4], 0
    // Predicated region
    $region2: #{tpu_custom_call.1} parent=1 // pred_check
      _
    $region3: #{tpu_custom_call.1} parent=1 // pred_check_branch
      %17 = sbr.rel (0) target = $region5
    $region4: #{tpu_custom_call.1} parent=1 // pred_region
      %s19 = ssub.s32 128, 128
      %20 = vsyncadd [#allocation3], %s19
      %s21 = sshll.u32 [#allocation2], 4
      %s22 = int_to_ptr.vmem [resolvable:$true] %s21
      %27 = dma.hbm_to_vmem [thread:$0]  %s0, 128, %s22, [#allocation3], 64, 64, 4
    $region5: #{tpu_custom_call.1} parent=1 // pred_fallthru
      _
    // Predicated region
    $region6: #{tpu_custom_call.1} parent=1 // pred_check
      _
    $region7: #{tpu_custom_call.1} parent=1 // pred_check_branch
      %29 = sbr.rel (0) target = $region9
    $region8: #{tpu_custom_call.1} parent=1 // pred_region
      %s31 = ssub.s32 1024, 1024
      %32 = vsyncadd [#allocation6], %s31
      %s33 = sshll.u32 [#allocation5], 4
      %s34 = int_to_ptr.vmem [resolvable:$true] %s33
      %39 = dma.hbm_to_vmem [thread:$0]  %s1, 1024, %s34, [#allocation6], 256, 256, 16
    $region9: #{tpu_custom_call.1} parent=1 // pred_fallthru
      _
    // Predicated region
    $region10: #{tpu_custom_call.1} parent=1 // pred_check
      _
    $region11: #{tpu_custom_call.1} parent=1 // pred_check_branch
      %41 = sbr.rel (0) target = $region13
    $region12: #{tpu_custom_call.1} parent=1 // pred_region
      _
    $region13: #{tpu_custom_call.1} parent=1 // pred_fallthru
      _
    // Predicated region
    $region14: #{tpu_custom_call.1} parent=1 // pred_check
      _
    $region15: #{tpu_custom_call.1} parent=1 // pred_check_branch
      %43 = sbr.rel (0) target = $region17
    $region16: #{tpu_custom_call.1} parent=1 // pred_region
      %s45 = ssub.s32 8192, 8192
      %46 = vsyncadd [#allocation6], %s45
      %s47 = sshll.u32 [#allocation7], 4
      %s48 = int_to_ptr.vmem [resolvable:$true] %s47
      %53 = dma.hbm_to_vmem [thread:$0]  %s3, 8192, %s48, [#allocation6], 128, 128, 8
    $region17: #{tpu_custom_call.1} parent=1 // pred_fallthru
      _
    // Predicated region
    $region18: #{tpu_custom_call.1} parent=1 // pred_check
      _
    $region19: #{tpu_custom_call.1} parent=1 // pred_check_branch
      %55 = sbr.rel (0) target = $region21
    $region20: #{tpu_custom_call.1} parent=1 // pred_region
      _
    $region21: #{tpu_custom_call.1} parent=1 // pred_fallthru
      _
    // Predicated region
    $region22: #{tpu_custom_call.1} parent=1 // pred_check
      _
    $region23: #{tpu_custom_call.1} parent=1 // pred_check_branch
      %57 = sbr.rel (0) target = $region25
    $region24: #{tpu_custom_call.1} parent=1 // pred_region
      %s59 = ssub.s32 2048, 2048
      %60 = vsyncadd [#allocation9], %s59
      %s61 = sshll.u32 [#allocation8], 4
      %s62 = int_to_ptr.vmem [resolvable:$true] %s61
      %67 = dma.hbm_to_vmem [thread:$0]  %s5, 2048, %s62, [#allocation9], 64, 64, 4
    $region25: #{tpu_custom_call.1} parent=1 // pred_fallthru
      _
    // Predicated region
    $region26: #{tpu_custom_call.1} parent=1 // pred_check
      _
    $region27: #{tpu_custom_call.1} parent=1 // pred_check_branch
      %69 = sbr.rel (0) target = $region29
    $region28: #{tpu_custom_call.1} parent=1 // pred_region
      _
    $region29: #{tpu_custom_call.1} parent=1 // pred_fallthru
      _
    // Predicated region
    $region30: #{tpu_custom_call.1} parent=1 // pred_check
      _
    $region31: #{tpu_custom_call.1} parent=1 // pred_check_branch
      %71 = sbr.rel (0) target = $region33
    $region32: #{tpu_custom_call.1} parent=1 // pred_region
      %72 = dma.done [#allocation3], 128
    $region33: #{tpu_custom_call.1} parent=1 // pred_fallthru
      _
    // Predicated region
    $region34: #{tpu_custom_call.1} parent=1 // pred_check
      _
    $region35: #{tpu_custom_call.1} parent=1 // pred_check_branch
      %74 = sbr.rel (0) target = $region37
    $region36: #{tpu_custom_call.1} parent=1 // pred_region
      %75 = dma.done [#allocation6], 1024
    $region37: #{tpu_custom_call.1} parent=1 // pred_fallthru
      _
    // Predicated region
    $region38: #{tpu_custom_call.1} parent=1 // pred_check
      _
    $region39: #{tpu_custom_call.1} parent=1 // pred_check_branch
      %77 = sbr.rel (0) target = $region41
    $region40: #{tpu_custom_call.1} parent=1 // pred_region
      %78 = dma.done [#allocation6], 8192
    $region41: #{tpu_custom_call.1} parent=1 // pred_fallthru
      _
    // Predicated region
    $region42: #{tpu_custom_call.1} parent=1 // pred_check
      _
    $region43: #{tpu_custom_call.1} parent=1 // pred_check_branch
      %80 = sbr.rel (0) target = $region45
    $region44: #{tpu_custom_call.1} parent=1 // pred_region
      %81 = dma.done [#allocation9], 2048
    $region45: #{tpu_custom_call.1} parent=1 // pred_fallthru
      _
    %v83 = vld [vmem:[#allocation2] sm:$0xf]
    %v84 = vld [vmem:[#allocation2 + $0x4] sm:$0xf]
    %v85 = vld [vmem:[#allocation5] sm:$0xff]
    %v86 = vld [vmem:[#allocation5 + $0x8] sm:$0xff]
    %v87 = vld [vmem:[#allocation5 + $0x10] sm:$0xff]
    %v88 = vld [vmem:[#allocation5 + $0x18] sm:$0xff]
    %v89 = vld [vmem:[#allocation5 + $0x20] sm:$0xff]
    %v90 = vld [vmem:[#allocation5 + $0x28] sm:$0xff]
    %v91 = vld [vmem:[#allocation5 + $0x30] sm:$0xff]
    %v92 = vld [vmem:[#allocation5 + $0x38] sm:$0xff]
    %v93 = vld [vmem:[%s2] sm:$0xf]
    %v95 = vlaneseq
    %v96 = vshrl.u32 %v95, 7
    %v97 = vsub.s32 0, %v96
    %v98 = vrot.slane %v93, %v97
    %v99 = vlaneseq
    %v100 = vshrl.u32 %v99, 7
    %v101 = vsub.s32 1, %v100
    %v102 = vrot.slane %v93, %v101
    %v103 = vlaneseq
    %v104 = vshrl.u32 %v103, 7
    %v105 = vsub.s32 2, %v104
    %v106 = vrot.slane %v93, %v105
    %v107 = vlaneseq
    %v108 = vshrl.u32 %v107, 7
    %v109 = vsub.s32 3, %v108
    %v110 = vrot.slane %v93, %v109
    %v117 = vunpack.c.l.b16 %v83
    %v118 = vunpack.c.l.b16 %v84
    %v119 = vpack.c.b16 %v118, %v117
    %v128 = vunpack.c.l.b16 %v85
    %v129 = vunpack.c.h.b16 %v85
    %v130 = vunpack.c.l.b16 %v86
    %v131 = vunpack.c.h.b16 %v86
    %v132 = vunpack.c.l.b16 %v87
    %v133 = vunpack.c.h.b16 %v87
    %v134 = vunpack.c.l.b16 %v88
    %v135 = vunpack.c.h.b16 %v88
    %v136 = vunpack.c.l.b16 %v89
    %v137 = vunpack.c.h.b16 %v89
    %v138 = vunpack.c.l.b16 %v90
    %v139 = vunpack.c.h.b16 %v90
    %v140 = vunpack.c.l.b16 %v91
    %v141 = vunpack.c.h.b16 %v91
    %v142 = vunpack.c.l.b16 %v92
    %v143 = vunpack.c.h.b16 %v92
    %v144 = vpack.c.b16 %v132, %v128
    %v145 = vpack.c.b16 %v133, %v129
    %v146 = vpack.c.b16 %v134, %v130
    %v147 = vpack.c.b16 %v135, %v131
    %v148 = vpack.c.b16 %v140, %v136
    %v149 = vpack.c.b16 %v141, %v137
    %v150 = vpack.c.b16 %v142, %v138
    %v151 = vpack.c.b16 %v143, %v139
    %vm160 = vcmask 261120
    %v162 = vsel %vm160, %v119, 0
    %164 = vmatprep.subr.bf16.mxu0 %v145
    %165 = vmatpush1.bf16.msra.mxu0 %v144
    %166 = vmatprep.subr.bf16.mxu0 %v149
    %167 = vmatpush1.bf16.msra.mxu0 %v148
    %168 = vmatprep.subr.bf16.mxu0 0
    %169 = vmatpush1.bf16.msra.mxu0 0
    %170 = vmatprep.subr.bf16.mxu0 0
    %171 = vmatpush1.bf16.msra.mxu0 0
    %172 = vmatprep.subr.bf16.mxu0 0
    %173 = vmatpush1.bf16.msra.mxu0 0
    %174 = vmatprep.subr.bf16.mxu0 0
    %175 = vmatpush1.bf16.msra.mxu0 0
    %176 = vmatprep.subr.bf16.mxu0 0
    %177 = vmatpush1.bf16.msra.mxu0 0
    %178 = vmatprep.subr.bf16.mxu0 0
    %179 = vmatpush1.bf16.msra.mxu0 0
    %180 = vmatprep.subr.bf16.mxu0 0
    %181 = vmatpush1.bf16.msra.mxu0 0
    %182 = vmatprep.subr.bf16.mxu0 0
    %183 = vmatpush1.bf16.msra.mxu0 0
    %184 = vmatprep.subr.bf16.mxu0 0
    %185 = vmatpush1.bf16.msra.mxu0 0
    %186 = vmatprep.subr.bf16.mxu0 0
    %187 = vmatpush1.bf16.msra.mxu0 0
    %188 = vmatprep.subr.bf16.mxu0 0
    %189 = vmatpush1.bf16.msra.mxu0 0
    %190 = vmatprep.subr.bf16.mxu0 0
    %191 = vmatpush1.bf16.msra.mxu0 0
    %192 = vmatprep.subr.bf16.mxu0 0
    %193 = vmatpush1.bf16.msra.mxu0 0
    %194 = vmatprep.subr.bf16.mxu0 0
    %195 = vmatpush1.bf16.msra.mxu0 0
    %196 = vmatprep.mubr.bf16.mxu0 0
    %197 = vmatmul.mubr.bf16.gmra.mrb[0].mxu0 %v162
    %v198 = vpop.f32.mrb[0].mxu0
    %v199 = vadd.f32 %v98, %v198
    %v200 = vpop.f32.mrb[0].mxu0
    %v201 = vadd.f32 %v102, %v200
    %v202 = vpop.f32.mrb[0].mxu0
    %v203 = vadd.f32 %v98, %v202
    %v204 = vpop.f32.mrb[0].mxu0
    %v205 = vadd.f32 %v102, %v204
    %206 = vdwg.mxu0
    %207 = vmatprep.subr.bf16.mxu0 %v147
    %208 = vmatpush1.bf16.msra.mxu0 %v146
    %209 = vmatprep.subr.bf16.mxu0 %v151
    %210 = vmatpush1.bf16.msra.mxu0 %v150
    %211 = vmatprep.subr.bf16.mxu0 0
    %212 = vmatpush1.bf16.msra.mxu0 0
    %213 = vmatprep.subr.bf16.mxu0 0
    %214 = vmatpush1.bf16.msra.mxu0 0
    %215 = vmatprep.subr.bf16.mxu0 0
    %216 = vmatpush1.bf16.msra.mxu0 0
    %217 = vmatprep.subr.bf16.mxu0 0
    %218 = vmatpush1.bf16.msra.mxu0 0
    %219 = vmatprep.subr.bf16.mxu0 0
    %220 = vmatpush1.bf16.msra.mxu0 0
    %221 = vmatprep.subr.bf16.mxu0 0
    %222 = vmatpush1.bf16.msra.mxu0 0
    %223 = vmatprep.subr.bf16.mxu0 0
    %224 = vmatpush1.bf16.msra.mxu0 0
    %225 = vmatprep.subr.bf16.mxu0 0
    %226 = vmatpush1.bf16.msra.mxu0 0
    %227 = vmatprep.subr.bf16.mxu0 0
    %228 = vmatpush1.bf16.msra.mxu0 0
    %229 = vmatprep.subr.bf16.mxu0 0
    %230 = vmatpush1.bf16.msra.mxu0 0
    %231 = vmatprep.subr.bf16.mxu0 0
    %232 = vmatpush1.bf16.msra.mxu0 0
    %233 = vmatprep.subr.bf16.mxu0 0
    %234 = vmatpush1.bf16.msra.mxu0 0
    %235 = vmatprep.subr.bf16.mxu0 0
    %236 = vmatpush1.bf16.msra.mxu0 0
    %237 = vmatprep.subr.bf16.mxu0 0
    %238 = vmatpush1.bf16.msra.mxu0 0
    %239 = vmatprep.mubr.bf16.mxu0 0
    %240 = vmatmul.mubr.bf16.gmra.mrb[0].mxu0 %v162
    %v241 = vpop.f32.mrb[0].mxu0
    %v242 = vadd.f32 %v106, %v241
    %v243 = vpop.f32.mrb[0].mxu0
    %v244 = vadd.f32 %v110, %v243
    %v245 = vpop.f32.mrb[0].mxu0
    %v246 = vadd.f32 %v106, %v245
    %v247 = vpop.f32.mrb[0].mxu0
    %v248 = vadd.f32 %v110, %v247
    %249 = vdwg.mxu0
    %v250 = vmax.f32 %v199, 0.0
    %v251 = vmax.f32 %v201, 0.0
    %v252 = vmax.f32 %v242, 0.0
    %v253 = vmax.f32 %v244, 0.0
    %v254 = vmax.f32 %v203, 0.0
    %v255 = vmax.f32 %v205, 0.0
    %v256 = vmax.f32 %v246, 0.0
    %v257 = vmax.f32 %v248, 0.0
    %v258 = vpack.c.bf16 %v254, %v250
    %v259 = vpack.c.bf16 %v255, %v251
    %v260 = vpack.c.bf16 %v256, %v252
    %v261 = vpack.c.bf16 %v257, %v253
    %v262 = vld [vmem:[#allocation7] sm:$0xff]
    %v263 = vld [vmem:[#allocation7 + $0x8] sm:$0xff]
    %v264 = vld [vmem:[#allocation7 + $0x10] sm:$0xff]
    %v265 = vld [vmem:[#allocation7 + $0x18] sm:$0xff]
    %v266 = vld [vmem:[#allocation7 + $0x20] sm:$0xff]
    %v267 = vld [vmem:[#allocation7 + $0x28] sm:$0xff]
    %v268 = vld [vmem:[#allocation7 + $0x30] sm:$0xff]
    %v269 = vld [vmem:[#allocation7 + $0x38] sm:$0xff]
    %v270 = vld [vmem:[#allocation7 + $0x40] sm:$0xff]
    %v271 = vld [vmem:[#allocation7 + $0x48] sm:$0xff]
    %v272 = vld [vmem:[#allocation7 + $0x50] sm:$0xff]
    %v273 = vld [vmem:[#allocation7 + $0x58] sm:$0xff]
    %v274 = vld [vmem:[#allocation7 + $0x60] sm:$0xff]
    %v275 = vld [vmem:[#allocation7 + $0x68] sm:$0xff]
    %v276 = vld [vmem:[#allocation7 + $0x70] sm:$0xff]
    %v277 = vld [vmem:[#allocation7 + $0x78] sm:$0xff]
    %v278 = vld [vmem:[#allocation7 + $0x80] sm:$0xff]
    %v279 = vld [vmem:[#allocation7 + $0x88] sm:$0xff]
    %v280 = vld [vmem:[#allocation7 + $0x90] sm:$0xff]
    %v281 = vld [vmem:[#allocation7 + $0x98] sm:$0xff]
    %v282 = vld [vmem:[#allocation7 + $0xa0] sm:$0xff]
    %v283 = vld [vmem:[#allocation7 + $0xa8] sm:$0xff]
    %v284 = vld [vmem:[#allocation7 + $0xb0] sm:$0xff]
    %v285 = vld [vmem:[#allocation7 + $0xb8] sm:$0xff]
    %v286 = vld [vmem:[#allocation7 + $0xc0] sm:$0xff]
    %v287 = vld [vmem:[#allocation7 + $0xc8] sm:$0xff]
    %v288 = vld [vmem:[#allocation7 + $0xd0] sm:$0xff]
    %v289 = vld [vmem:[#allocation7 + $0xd8] sm:$0xff]
    %v290 = vld [vmem:[#allocation7 + $0xe0] sm:$0xff]
    %v291 = vld [vmem:[#allocation7 + $0xe8] sm:$0xff]
    %v292 = vld [vmem:[#allocation7 + $0xf0] sm:$0xff]
    %v293 = vld [vmem:[#allocation7 + $0xf8] sm:$0xff]
    %v294 = vld [vmem:[#allocation7 + $0x100] sm:$0xff]
    %v295 = vld [vmem:[#allocation7 + $0x108] sm:$0xff]
    %v296 = vld [vmem:[#allocation7 + $0x110] sm:$0xff]
    %v297 = vld [vmem:[#allocation7 + $0x118] sm:$0xff]
    %v298 = vld [vmem:[#allocation7 + $0x120] sm:$0xff]
    %v299 = vld [vmem:[#allocation7 + $0x128] sm:$0xff]
    %v300 = vld [vmem:[#allocation7 + $0x130] sm:$0xff]
    %v301 = vld [vmem:[#allocation7 + $0x138] sm:$0xff]
    %v302 = vld [vmem:[#allocation7 + $0x140] sm:$0xff]
    %v303 = vld [vmem:[#allocation7 + $0x148] sm:$0xff]
    %v304 = vld [vmem:[#allocation7 + $0x150] sm:$0xff]
    %v305 = vld [vmem:[#allocation7 + $0x158] sm:$0xff]
    %v306 = vld [vmem:[#allocation7 + $0x160] sm:$0xff]
    %v307 = vld [vmem:[#allocation7 + $0x168] sm:$0xff]
    %v308 = vld [vmem:[#allocation7 + $0x170] sm:$0xff]
    %v309 = vld [vmem:[#allocation7 + $0x178] sm:$0xff]
    %v310 = vld [vmem:[#allocation7 + $0x180] sm:$0xff]
    %v311 = vld [vmem:[#allocation7 + $0x188] sm:$0xff]
    %v312 = vld [vmem:[#allocation7 + $0x190] sm:$0xff]
    %v313 = vld [vmem:[#allocation7 + $0x198] sm:$0xff]
    %v314 = vld [vmem:[#allocation7 + $0x1a0] sm:$0xff]
    %v315 = vld [vmem:[#allocation7 + $0x1a8] sm:$0xff]
    %v316 = vld [vmem:[#allocation7 + $0x1b0] sm:$0xff]
    %v317 = vld [vmem:[#allocation7 + $0x1b8] sm:$0xff]
    %v318 = vld [vmem:[#allocation7 + $0x1c0] sm:$0xff]
    %v319 = vld [vmem:[#allocation7 + $0x1c8] sm:$0xff]
    %v320 = vld [vmem:[#allocation7 + $0x1d0] sm:$0xff]
    %v321 = vld [vmem:[#allocation7 + $0x1d8] sm:$0xff]
    %v322 = vld [vmem:[#allocation7 + $0x1e0] sm:$0xff]
    %v323 = vld [vmem:[#allocation7 + $0x1e8] sm:$0xff]
    %v324 = vld [vmem:[#allocation7 + $0x1f0] sm:$0xff]
    %v325 = vld [vmem:[#allocation7 + $0x1f8] sm:$0xff]
    %v326 = vld [vmem:[%s4] sm:$0x3]
    %v328 = vlaneseq
    %v329 = vshrl.u32 %v328, 7
    %v330 = vsub.s32 0, %v329
    %v331 = vrot.slane %v326, %v330
    %v332 = vlaneseq
    %v333 = vshrl.u32 %v332, 7
    %v334 = vsub.s32 1, %v333
    %v335 = vrot.slane %v326, %v334
    %v402 = vunpack.c.l.b16 %v262
    %v403 = vunpack.c.h.b16 %v262
    %v404 = vunpack.c.l.b16 %v263
    %v405 = vunpack.c.h.b16 %v263
    %v406 = vunpack.c.l.b16 %v264
    %v407 = vunpack.c.h.b16 %v264
    %v408 = vunpack.c.l.b16 %v265
    %v409 = vunpack.c.h.b16 %v265
    %v410 = vunpack.c.l.b16 %v266
    %v411 = vunpack.c.h.b16 %v266
    %v412 = vunpack.c.l.b16 %v267
    %v413 = vunpack.c.h.b16 %v267
    %v414 = vunpack.c.l.b16 %v268
    %v415 = vunpack.c.h.b16 %v268
    %v416 = vunpack.c.l.b16 %v269
    %v417 = vunpack.c.h.b16 %v269
    %v418 = vunpack.c.l.b16 %v270
    %v419 = vunpack.c.h.b16 %v270
    %v420 = vunpack.c.l.b16 %v271
    %v421 = vunpack.c.h.b16 %v271
    %v422 = vunpack.c.l.b16 %v272
    %v423 = vunpack.c.h.b16 %v272
    %v424 = vunpack.c.l.b16 %v273
    %v425 = vunpack.c.h.b16 %v273
    %v426 = vunpack.c.l.b16 %v274
    %v427 = vunpack.c.h.b16 %v274
    %v428 = vunpack.c.l.b16 %v275
    %v429 = vunpack.c.h.b16 %v275
    %v430 = vunpack.c.l.b16 %v276
    %v431 = vunpack.c.h.b16 %v276
    %v432 = vunpack.c.l.b16 %v277
    %v433 = vunpack.c.h.b16 %v277
    %v434 = vunpack.c.l.b16 %v278
    %v435 = vunpack.c.h.b16 %v278
    %v436 = vunpack.c.l.b16 %v279
    %v437 = vunpack.c.h.b16 %v279
    %v438 = vunpack.c.l.b16 %v280
    %v439 = vunpack.c.h.b16 %v280
    %v440 = vunpack.c.l.b16 %v281
    %v441 = vunpack.c.h.b16 %v281
    %v442 = vunpack.c.l.b16 %v282
    %v443 = vunpack.c.h.b16 %v282
    %v444 = vunpack.c.l.b16 %v283
    %v445 = vunpack.c.h.b16 %v283
    %v446 = vunpack.c.l.b16 %v284
    %v447 = vunpack.c.h.b16 %v284
    %v448 = vunpack.c.l.b16 %v285
    %v449 = vunpack.c.h.b16 %v285
    %v450 = vunpack.c.l.b16 %v286
    %v451 = vunpack.c.h.b16 %v286
    %v452 = vunpack.c.l.b16 %v287
    %v453 = vunpack.c.h.b16 %v287
    %v454 = vunpack.c.l.b16 %v288
    %v455 = vunpack.c.h.b16 %v288
    %v456 = vunpack.c.l.b16 %v289
    %v457 = vunpack.c.h.b16 %v289
    %v458 = vunpack.c.l.b16 %v290
    %v459 = vunpack.c.h.b16 %v290
    %v460 = vunpack.c.l.b16 %v291
    %v461 = vunpack.c.h.b16 %v291
    %v462 = vunpack.c.l.b16 %v292
    %v463 = vunpack.c.h.b16 %v292
    %v464 = vunpack.c.l.b16 %v293
    %v465 = vunpack.c.h.b16 %v293
    %v466 = vunpack.c.l.b16 %v294
    %v467 = vunpack.c.h.b16 %v294
    %v468 = vunpack.c.l.b16 %v295
    %v469 = vunpack.c.h.b16 %v295
    %v470 = vunpack.c.l.b16 %v296
    %v471 = vunpack.c.h.b16 %v296
    %v472 = vunpack.c.l.b16 %v297
    %v473 = vunpack.c.h.b16 %v297
    %v474 = vunpack.c.l.b16 %v298
    %v475 = vunpack.c.h.b16 %v298
    %v476 = vunpack.c.l.b16 %v299
    %v477 = vunpack.c.h.b16 %v299
    %v478 = vunpack.c.l.b16 %v300
    %v479 = vunpack.c.h.b16 %v300
    %v480 = vunpack.c.l.b16 %v301
    %v481 = vunpack.c.h.b16 %v301
    %v482 = vunpack.c.l.b16 %v302
    %v483 = vunpack.c.h.b16 %v302
    %v484 = vunpack.c.l.b16 %v303
    %v485 = vunpack.c.h.b16 %v303
    %v486 = vunpack.c.l.b16 %v304
    %v487 = vunpack.c.h.b16 %v304
    %v488 = vunpack.c.l.b16 %v305
    %v489 = vunpack.c.h.b16 %v305
    %v490 = vunpack.c.l.b16 %v306
    %v491 = vunpack.c.h.b16 %v306
    %v492 = vunpack.c.l.b16 %v307
    %v493 = vunpack.c.h.b16 %v307
    %v494 = vunpack.c.l.b16 %v308
    %v495 = vunpack.c.h.b16 %v308
    %v496 = vunpack.c.l.b16 %v309
    %v497 = vunpack.c.h.b16 %v309
    %v498 = vunpack.c.l.b16 %v310
    %v499 = vunpack.c.h.b16 %v310
    %v500 = vunpack.c.l.b16 %v311
    %v501 = vunpack.c.h.b16 %v311
    %v502 = vunpack.c.l.b16 %v312
    %v503 = vunpack.c.h.b16 %v312
    %v504 = vunpack.c.l.b16 %v313
    %v505 = vunpack.c.h.b16 %v313
    %v506 = vunpack.c.l.b16 %v314
    %v507 = vunpack.c.h.b16 %v314
    %v508 = vunpack.c.l.b16 %v315
    %v509 = vunpack.c.h.b16 %v315
    %v510 = vunpack.c.l.b16 %v316
    %v511 = vunpack.c.h.b16 %v316
    %v512 = vunpack.c.l.b16 %v317
    %v513 = vunpack.c.h.b16 %v317
    %v514 = vunpack.c.l.b16 %v318
    %v515 = vunpack.c.h.b16 %v318
    %v516 = vunpack.c.l.b16 %v319
    %v517 = vunpack.c.h.b16 %v319
    %v518 = vunpack.c.l.b16 %v320
    %v519 = vunpack.c.h.b16 %v320
    %v520 = vunpack.c.l.b16 %v321
    %v521 = vunpack.c.h.b16 %v321
    %v522 = vunpack.c.l.b16 %v322
    %v523 = vunpack.c.h.b16 %v322
    %v524 = vunpack.c.l.b16 %v323
    %v525 = vunpack.c.h.b16 %v323
    %v526 = vunpack.c.l.b16 %v324
    %v527 = vunpack.c.h.b16 %v324
    %v528 = vunpack.c.l.b16 %v325
    %v529 = vunpack.c.h.b16 %v325
    %v530 = vpack.c.b16 %v404, %v402
    %v531 = vpack.c.b16 %v405, %v403
    %v532 = vpack.c.b16 %v408, %v406
    %v533 = vpack.c.b16 %v409, %v407
    %v534 = vpack.c.b16 %v412, %v410
    %v535 = vpack.c.b16 %v413, %v411
    %v536 = vpack.c.b16 %v416, %v414
    %v537 = vpack.c.b16 %v417, %v415
    %v538 = vpack.c.b16 %v420, %v418
    %v539 = vpack.c.b16 %v421, %v419
    %v540 = vpack.c.b16 %v424, %v422
    %v541 = vpack.c.b16 %v425, %v423
    %v542 = vpack.c.b16 %v428, %v426
    %v543 = vpack.c.b16 %v429, %v427
    %v544 = vpack.c.b16 %v432, %v430
    %v545 = vpack.c.b16 %v433, %v431
    %v546 = vpack.c.b16 %v436, %v434
    %v547 = vpack.c.b16 %v437, %v435
    %v548 = vpack.c.b16 %v440, %v438
    %v549 = vpack.c.b16 %v441, %v439
    %v550 = vpack.c.b16 %v444, %v442
    %v551 = vpack.c.b16 %v445, %v443
    %v552 = vpack.c.b16 %v448, %v446
    %v553 = vpack.c.b16 %v449, %v447
    %v554 = vpack.c.b16 %v452, %v450
    %v555 = vpack.c.b16 %v453, %v451
    %v556 = vpack.c.b16 %v456, %v454
    %v557 = vpack.c.b16 %v457, %v455
    %v558 = vpack.c.b16 %v460, %v458
    %v559 = vpack.c.b16 %v461, %v459
    %v560 = vpack.c.b16 %v464, %v462
    %v561 = vpack.c.b16 %v465, %v463
    %v562 = vpack.c.b16 %v468, %v466
    %v563 = vpack.c.b16 %v469, %v467
    %v564 = vpack.c.b16 %v472, %v470
    %v565 = vpack.c.b16 %v473, %v471
    %v566 = vpack.c.b16 %v476, %v474
    %v567 = vpack.c.b16 %v477, %v475
    %v568 = vpack.c.b16 %v480, %v478
    %v569 = vpack.c.b16 %v481, %v479
    %v570 = vpack.c.b16 %v484, %v482
    %v571 = vpack.c.b16 %v485, %v483
    %v572 = vpack.c.b16 %v488, %v486
    %v573 = vpack.c.b16 %v489, %v487
    %v574 = vpack.c.b16 %v492, %v490
    %v575 = vpack.c.b16 %v493, %v491
    %v576 = vpack.c.b16 %v496, %v494
    %v577 = vpack.c.b16 %v497, %v495
    %v578 = vpack.c.b16 %v500, %v498
    %v579 = vpack.c.b16 %v501, %v499
    %v580 = vpack.c.b16 %v504, %v502
    %v581 = vpack.c.b16 %v505, %v503
    %v582 = vpack.c.b16 %v508, %v506
    %v583 = vpack.c.b16 %v509, %v507
    %v584 = vpack.c.b16 %v512, %v510
    %v585 = vpack.c.b16 %v513, %v511
    %v586 = vpack.c.b16 %v516, %v514
    %v587 = vpack.c.b16 %v517, %v515
    %v588 = vpack.c.b16 %v520, %v518
    %v589 = vpack.c.b16 %v521, %v519
    %v590 = vpack.c.b16 %v524, %v522
    %v591 = vpack.c.b16 %v525, %v523
    %v592 = vpack.c.b16 %v528, %v526
    %v593 = vpack.c.b16 %v529, %v527
    %658 = vmatprep.subr.bf16.mxu0 %v531
    %659 = vmatpush1.bf16.msra.mxu0 %v530
    %660 = vmatprep.subr.bf16.mxu0 %v533
    %661 = vmatpush1.bf16.msra.mxu0 %v532
    %662 = vmatprep.subr.bf16.mxu0 %v535
    %663 = vmatpush1.bf16.msra.mxu0 %v534
    %664 = vmatprep.subr.bf16.mxu0 %v537
    %665 = vmatpush1.bf16.msra.mxu0 %v536
    %666 = vmatprep.subr.bf16.mxu0 %v539
    %667 = vmatpush1.bf16.msra.mxu0 %v538
    %668 = vmatprep.subr.bf16.mxu0 %v541
    %669 = vmatpush1.bf16.msra.mxu0 %v540
    %670 = vmatprep.subr.bf16.mxu0 %v543
    %671 = vmatpush1.bf16.msra.mxu0 %v542
    %672 = vmatprep.subr.bf16.mxu0 %v545
    %673 = vmatpush1.bf16.msra.mxu0 %v544
    %674 = vmatprep.subr.bf16.mxu0 %v547
    %675 = vmatpush1.bf16.msra.mxu0 %v546
    %676 = vmatprep.subr.bf16.mxu0 %v549
    %677 = vmatpush1.bf16.msra.mxu0 %v548
    %678 = vmatprep.subr.bf16.mxu0 %v551
    %679 = vmatpush1.bf16.msra.mxu0 %v550
    %680 = vmatprep.subr.bf16.mxu0 %v553
    %681 = vmatpush1.bf16.msra.mxu0 %v552
    %682 = vmatprep.subr.bf16.mxu0 %v555
    %683 = vmatpush1.bf16.msra.mxu0 %v554
    %684 = vmatprep.subr.bf16.mxu0 %v557
    %685 = vmatpush1.bf16.msra.mxu0 %v556
    %686 = vmatprep.subr.bf16.mxu0 %v559
    %687 = vmatpush1.bf16.msra.mxu0 %v558
    %688 = vmatprep.subr.bf16.mxu0 %v561
    %689 = vmatpush1.bf16.msra.mxu0 %v560
    %690 = vmatprep.mubr.bf16.mxu0 %v259
    %691 = vmatmul.mubr.bf16.gmra.mrb[0].mxu0 %v258
    %v692 = vpop.f32.mrb[0].mxu0
    %v693 = vadd.f32 %v331, %v692
    %v694 = vpop.f32.mrb[0].mxu0
    %v695 = vadd.f32 %v335, %v694
    %v696 = vpop.f32.mrb[0].mxu0
    %v697 = vadd.f32 %v331, %v696
    %v698 = vpop.f32.mrb[0].mxu0
    %v699 = vadd.f32 %v335, %v698
    %700 = vdwg.mxu0
    %701 = vmatprep.subr.bf16.mxu0 %v563
    %702 = vmatpush1.bf16.msra.mxu0 %v562
    %703 = vmatprep.subr.bf16.mxu0 %v565
    %704 = vmatpush1.bf16.msra.mxu0 %v564
    %705 = vmatprep.subr.bf16.mxu0 %v567
    %706 = vmatpush1.bf16.msra.mxu0 %v566
    %707 = vmatprep.subr.bf16.mxu0 %v569
    %708 = vmatpush1.bf16.msra.mxu0 %v568
    %709 = vmatprep.subr.bf16.mxu0 %v571
    %710 = vmatpush1.bf16.msra.mxu0 %v570
    %711 = vmatprep.subr.bf16.mxu0 %v573
    %712 = vmatpush1.bf16.msra.mxu0 %v572
    %713 = vmatprep.subr.bf16.mxu0 %v575
    %714 = vmatpush1.bf16.msra.mxu0 %v574
    %715 = vmatprep.subr.bf16.mxu0 %v577
    %716 = vmatpush1.bf16.msra.mxu0 %v576
    %717 = vmatprep.subr.bf16.mxu0 %v579
    %718 = vmatpush1.bf16.msra.mxu0 %v578
    %719 = vmatprep.subr.bf16.mxu0 %v581
    %720 = vmatpush1.bf16.msra.mxu0 %v580
    %721 = vmatprep.subr.bf16.mxu0 %v583
    %722 = vmatpush1.bf16.msra.mxu0 %v582
    %723 = vmatprep.subr.bf16.mxu0 %v585
    %724 = vmatpush1.bf16.msra.mxu0 %v584
    %725 = vmatprep.subr.bf16.mxu0 %v587
    %726 = vmatpush1.bf16.msra.mxu0 %v586
    %727 = vmatprep.subr.bf16.mxu0 %v589
    %728 = vmatpush1.bf16.msra.mxu0 %v588
    %729 = vmatprep.subr.bf16.mxu0 %v591
    %730 = vmatpush1.bf16.msra.mxu0 %v590
    %731 = vmatprep.subr.bf16.mxu0 %v593
    %732 = vmatpush1.bf16.msra.mxu0 %v592
    %733 = vmatprep.mubr.bf16.mxu0 %v261
    %734 = vmatmul.mubr.bf16.gmra.mrb[0].mxu0 %v260
    %v735 = vpop.f32.mrb[0].mxu0
    %v736 = vadd.f32 %v693, %v735
    %v737 = vpop.f32.mrb[0].mxu0
    %v738 = vadd.f32 %v695, %v737
    %v739 = vpop.f32.mrb[0].mxu0
    %v740 = vadd.f32 %v697, %v739
    %v741 = vpop.f32.mrb[0].mxu0
    %v742 = vadd.f32 %v699, %v741
    %743 = vdwg.mxu0
    %v744 = vmax.f32 %v736, 0.0
    %v745 = vmax.f32 %v738, 0.0
    %v746 = vmax.f32 %v740, 0.0
    %v747 = vmax.f32 %v742, 0.0
    %v748 = vpack.c.bf16 %v746, %v744
    %v749 = vpack.c.bf16 %v747, %v745
    %v750 = vld [vmem:[#allocation8] sm:$0xf]
    %v751 = vld [vmem:[#allocation8 + $0x4] sm:$0xf]
    %v752 = vld [vmem:[#allocation8 + $0x8] sm:$0xf]
    %v753 = vld [vmem:[#allocation8 + $0xc] sm:$0xf]
    %v754 = vld [vmem:[#allocation8 + $0x10] sm:$0xf]
    %v755 = vld [vmem:[#allocation8 + $0x14] sm:$0xf]
    %v756 = vld [vmem:[#allocation8 + $0x18] sm:$0xf]
    %v757 = vld [vmem:[#allocation8 + $0x1c] sm:$0xf]
    %v758 = vld [vmem:[#allocation8 + $0x20] sm:$0xf]
    %v759 = vld [vmem:[#allocation8 + $0x24] sm:$0xf]
    %v760 = vld [vmem:[#allocation8 + $0x28] sm:$0xf]
    %v761 = vld [vmem:[#allocation8 + $0x2c] sm:$0xf]
    %v762 = vld [vmem:[#allocation8 + $0x30] sm:$0xf]
    %v763 = vld [vmem:[#allocation8 + $0x34] sm:$0xf]
    %v764 = vld [vmem:[#allocation8 + $0x38] sm:$0xf]
    %v765 = vld [vmem:[#allocation8 + $0x3c] sm:$0xf]
    %v766 = vld [vmem:[#allocation8 + $0x40] sm:$0xf]
    %v767 = vld [vmem:[#allocation8 + $0x44] sm:$0xf]
    %v768 = vld [vmem:[#allocation8 + $0x48] sm:$0xf]
    %v769 = vld [vmem:[#allocation8 + $0x4c] sm:$0xf]
    %v770 = vld [vmem:[#allocation8 + $0x50] sm:$0xf]
    %v771 = vld [vmem:[#allocation8 + $0x54] sm:$0xf]
    %v772 = vld [vmem:[#allocation8 + $0x58] sm:$0xf]
    %v773 = vld [vmem:[#allocation8 + $0x5c] sm:$0xf]
    %v774 = vld [vmem:[#allocation8 + $0x60] sm:$0xf]
    %v775 = vld [vmem:[#allocation8 + $0x64] sm:$0xf]
    %v776 = vld [vmem:[#allocation8 + $0x68] sm:$0xf]
    %v777 = vld [vmem:[#allocation8 + $0x6c] sm:$0xf]
    %v778 = vld [vmem:[#allocation8 + $0x70] sm:$0xf]
    %v779 = vld [vmem:[#allocation8 + $0x74] sm:$0xf]
    %v780 = vld [vmem:[#allocation8 + $0x78] sm:$0xf]
    %v781 = vld [vmem:[#allocation8 + $0x7c] sm:$0xf]
    %v782 = vld [vmem:[%s6] sm:$0x1]
    %v784 = vlaneseq
    %v785 = vshrl.u32 %v784, 7
    %v786 = vsub.s32 0, %v785
    %v787 = vrot.slane %v782, %v786
    %v821 = vunpack.c.l.b16 %v750
    %v822 = vunpack.c.l.b16 %v751
    %v823 = vunpack.c.l.b16 %v752
    %v824 = vunpack.c.l.b16 %v753
    %v825 = vunpack.c.l.b16 %v754
    %v826 = vunpack.c.l.b16 %v755
    %v827 = vunpack.c.l.b16 %v756
    %v828 = vunpack.c.l.b16 %v757
    %v829 = vunpack.c.l.b16 %v758
    %v830 = vunpack.c.l.b16 %v759
    %v831 = vunpack.c.l.b16 %v760
    %v832 = vunpack.c.l.b16 %v761
    %v833 = vunpack.c.l.b16 %v762
    %v834 = vunpack.c.l.b16 %v763
    %v835 = vunpack.c.l.b16 %v764
    %v836 = vunpack.c.l.b16 %v765
    %v837 = vunpack.c.l.b16 %v766
    %v838 = vunpack.c.l.b16 %v767
    %v839 = vunpack.c.l.b16 %v768
    %v840 = vunpack.c.l.b16 %v769
    %v841 = vunpack.c.l.b16 %v770
    %v842 = vunpack.c.l.b16 %v771
    %v843 = vunpack.c.l.b16 %v772
    %v844 = vunpack.c.l.b16 %v773
    %v845 = vunpack.c.l.b16 %v774
    %v846 = vunpack.c.l.b16 %v775
    %v847 = vunpack.c.l.b16 %v776
    %v848 = vunpack.c.l.b16 %v777
    %v849 = vunpack.c.l.b16 %v778
    %v850 = vunpack.c.l.b16 %v779
    %v851 = vunpack.c.l.b16 %v780
    %v852 = vunpack.c.l.b16 %v781
    %v853 = vpack.c.b16 %v822, %v821
    %v854 = vpack.c.b16 %v824, %v823
    %v855 = vpack.c.b16 %v826, %v825
    %v856 = vpack.c.b16 %v828, %v827
    %v857 = vpack.c.b16 %v830, %v829
    %v858 = vpack.c.b16 %v832, %v831
    %v859 = vpack.c.b16 %v834, %v833
    %v860 = vpack.c.b16 %v836, %v835
    %v861 = vpack.c.b16 %v838, %v837
    %v862 = vpack.c.b16 %v840, %v839
    %v863 = vpack.c.b16 %v842, %v841
    %v864 = vpack.c.b16 %v844, %v843
    %v865 = vpack.c.b16 %v846, %v845
    %v866 = vpack.c.b16 %v848, %v847
    %v867 = vpack.c.b16 %v850, %v849
    %v868 = vpack.c.b16 %v852, %v851
    %885 = vmatprep.subr.bf16.mxu0 0
    %886 = vmatpush1.bf16.msra.mxu0 %v853
    %887 = vmatprep.subr.bf16.mxu0 0
    %888 = vmatpush1.bf16.msra.mxu0 %v854
    %889 = vmatprep.subr.bf16.mxu0 0
    %890 = vmatpush1.bf16.msra.mxu0 %v855
    %891 = vmatprep.subr.bf16.mxu0 0
    %892 = vmatpush1.bf16.msra.mxu0 %v856
    %893 = vmatprep.subr.bf16.mxu0 0
    %894 = vmatpush1.bf16.msra.mxu0 %v857
    %895 = vmatprep.subr.bf16.mxu0 0
    %896 = vmatpush1.bf16.msra.mxu0 %v858
    %897 = vmatprep.subr.bf16.mxu0 0
    %898 = vmatpush1.bf16.msra.mxu0 %v859
    %899 = vmatprep.subr.bf16.mxu0 0
    %900 = vmatpush1.bf16.msra.mxu0 %v860
    %901 = vmatprep.subr.bf16.mxu0 0
    %902 = vmatpush1.bf16.msra.mxu0 %v861
    %903 = vmatprep.subr.bf16.mxu0 0
    %904 = vmatpush1.bf16.msra.mxu0 %v862
    %905 = vmatprep.subr.bf16.mxu0 0
    %906 = vmatpush1.bf16.msra.mxu0 %v863
    %907 = vmatprep.subr.bf16.mxu0 0
    %908 = vmatpush1.bf16.msra.mxu0 %v864
    %909 = vmatprep.subr.bf16.mxu0 0
    %910 = vmatpush1.bf16.msra.mxu0 %v865
    %911 = vmatprep.subr.bf16.mxu0 0
    %912 = vmatpush1.bf16.msra.mxu0 %v866
    %913 = vmatprep.subr.bf16.mxu0 0
    %914 = vmatpush1.bf16.msra.mxu0 %v867
    %915 = vmatprep.subr.bf16.mxu0 0
    %916 = vmatpush1.bf16.msra.mxu0 %v868
    %917 = vmatprep.mubr.bf16.mxu0 %v749
    %918 = vmatmul.mubr.bf16.gmra.mrb[0].mxu0 %v748
    %v919 = vpop.f32.mrb[0].mxu0
    %v920 = vadd.f32 %v787, %v919
    %v921 = vpop.f32.mrb[0].mxu0
    %v922 = vpop.f32.mrb[0].mxu0
    %v923 = vadd.f32 %v787, %v922
    %v924 = vpop.f32.mrb[0].mxu0
    %925 = vdwg.mxu0
    %v926 = vtanh.pop %v920
    %v927 = vtanh.pop %v923
    %v928 = vadd.f32 %v926, 1.0
    %v929 = vadd.f32 %v927, 1.0
    %v930 = vmul.f32 %v928, 5.0
    %v931 = vmul.f32 %v929, 5.0
    %v932 = vlaneseq
    %v933 = vand.u32 %v932, 127
    %vm934 = vcmp.lt.s32.totalorder %v933, 8
    %v935 = vsel %vm934, %v920, %v930
    %v936 = vsel %vm934, %v923, %v931
    %v937 = vpack.c.bf16 %v936, %v935
    %v939 = vunpack.c.l.b16 %v937
    %v940 = vunpack.c.h.b16 %v937
    %v941 = vpack.c.b16 %v939, %v939
    %v942 = vpack.c.b16 %v940, %v940
    %945 = vst [vmem:[#allocation10] sm:$0xf] %v941
    %946 = vst [vmem:[#allocation10 + $0x4] sm:$0xf] %v942
    // Predicated region
    $region46: #{tpu_custom_call.1} parent=1 // pred_check
      _
    $region47: #{tpu_custom_call.1} parent=1 // pred_check_branch
      %948 = sbr.rel (0) target = $region49
    $region48: #{tpu_custom_call.1} parent=1 // pred_region
      %s950 = ssub.s32 128, 128
      %951 = vsyncadd [#allocation4], %s950
      %s952 = sshll.u32 [#allocation10], 4
      %s953 = int_to_ptr.vmem [resolvable:$true] %s952
      %958 = dma.vmem_to_hbm [thread:$0]  %s953, 128, %s7, [#allocation4], 64, 64, 4
    $region49: #{tpu_custom_call.1} parent=1 // pred_fallthru
      _
    // Predicated region
    $region50: #{tpu_custom_call.1} parent=1 // pred_check
      _
    $region51: #{tpu_custom_call.1} parent=1 // pred_check_branch
      %960 = sbr.rel (0) target = $region53
    $region52: #{tpu_custom_call.1} parent=1 // pred_region
      %961 = dma.done [#allocation4], 128
    $region53: #{tpu_custom_call.1} parent=1 // pred_fallthru
      _
    %962 = vsyncpa [#allocation3], 1
    %963 = vsyncpa [#allocation6], 1
    %964 = vsyncpa [#allocation9], 1
    %965 = vsyncpa [#allocation4], 1

</llo_original>
